<compile_context>
chip_gen: v7x
topology: tpu7x:2x2x1
jax: 0.10.0
libtpu: 0.0.40
codegen_flags: <defaults>
</compile_context>

<pallas_src>
import jax
import jax.numpy as jnp
from jax.experimental import pallas as pl
from jax.experimental.pallas import tpu as pltpu

EPS = 1e-5      # nn.InstanceNorm1d default eps
_LANE = 128


# --------------------------------------------------------------------------- #
# Kernels
# --------------------------------------------------------------------------- #
def add_norm_kernel(x1_ref, x2_ref, g_ref, b_ref, o_ref):
    """Fused add + instance-norm for one (batch-tile, channel-tile), full seq."""
    # x1/x2/o: (TB, S, TD) tiles; g/b: (1, TD) affine params.
    x = x1_ref[...].astype(jnp.float32) + x2_ref[...].astype(jnp.float32)
    inv_n = jnp.float32(1.0 / x.shape[1])
    mean = jnp.sum(x, axis=1, keepdims=True) * inv_n               # (TB, 1, TD)
    xc = x - mean
    var = jnp.sum(xc * xc, axis=1, keepdims=True) * inv_n          # two-pass var
    inv = jax.lax.rsqrt(var + EPS)
    scale = g_ref[...].astype(jnp.float32) * inv                   # (TB, 1, TD)
    beta = b_ref[...].astype(jnp.float32)                          # (1, TD)
    # NOTE(v5e): if the single vector-store slot ever saturates on spilled f32
    # temps, recompute x1+x2 here instead of reusing `xc` (trades spill stores
    # for extra loads, which v5e has slack for).
    o_ref[...] = (xc * scale + beta).astype(o_ref.dtype)


def _make_stats_kernel(s_total, ts):
    """Per-(batch,channel) running sum / sum-of-squares over S chunks."""
    need_mask = (s_total % ts) != 0

    def stats_kernel(x1_ref, x2_ref, sum_ref, ssq_ref):
        s = pl.program_id(2)

        @pl.when(s == 0)
        def _():
            sum_ref[...] = jnp.zeros_like(sum_ref)
            ssq_ref[...] = jnp.zeros_like(ssq_ref)

        x = x1_ref[...].astype(jnp.float32) + x2_ref[...].astype(jnp.float32)
        if need_mask:                      # ragged last S chunk: zero OOB rows
            row = jax.lax.broadcasted_iota(jnp.int32, x.shape, 1)
            x = jnp.where(row + s * ts < s_total, x, 0.0)
        sum_ref[...] += jnp.sum(x, axis=1, keepdims=True)
        ssq_ref[...] += jnp.sum(x * x, axis=1, keepdims=True)

    return stats_kernel


def _make_apply_kernel(s_total):
    """Apply the normalization using precomputed per-(batch,channel) moments."""
    inv_n = 1.0 / float(s_total)

    def apply_kernel(x1_ref, x2_ref, sum_ref, ssq_ref, g_ref, b_ref, o_ref):
        x = x1_ref[...].astype(jnp.float32) + x2_ref[...].astype(jnp.float32)
        mean = sum_ref[...] * inv_n                                 # (TB, 1, TD)
        var = jnp.maximum(ssq_ref[...] * inv_n - mean * mean, 0.0)
        inv = jax.lax.rsqrt(var + EPS)
        scale = g_ref[...].astype(jnp.float32) * inv                # (TB, 1, TD)
        shift = b_ref[...].astype(jnp.float32) - mean * scale
        o_ref[...] = (x * scale + shift).astype(o_ref.dtype)

    return apply_kernel


# --------------------------------------------------------------------------- #
# Tile planning (generation-aware)
# --------------------------------------------------------------------------- #
def _vmem_limit_bytes():
    """Scoped VMEM limit derived from the chip's physical VMEM capacity."""
    try:
        cap = int(pltpu.get_tpu_info().vmem_capacity_bytes)
    except Exception:
        cap = 64 << 20                      # conservative (v7x) fallback
    # ~40 MiB on v7x (64 MiB VMEM), ~80 MiB on v5e/v6e (128 MiB VMEM).
    return max(min(cap * 5 // 8, 100 << 20), 16 << 20)


def _vmem_need(block_elems, itemsize):
    """Estimated VMEM for one grid step: 2 inputs + 1 output, double-buffered,
    plus ~2 materialized f32 temporaries (x and x - mean)."""
    return block_elems * (6 * itemsize + 8)


def _plan(B, S, D, itemsize, tile_budget):
    """Returns (tb, ts, tile_d).  ts is None => fused full-S path."""
    if D % _LANE == 0:
        d_tiles = list(range(_LANE, min(D, 1024) + 1, _LANE))
    else:
        # Non-multiple-of-128 channel count: a block dim equal to the full
        # array dim is legal; tail stores are masked (only hurts when D < 128).
        d_tiles = [D]

    # ---- fused full-S path -------------------------------------------------
    fused_d = None
    for t in d_tiles:
        if _vmem_need(S * t, itemsize) <= tile_budget:
            fused_d = t                      # keep the widest tile that fits
    if fused_d is not None:
        tile_d = fused_d
        grid_d = pl.cdiv(D, tile_d)
        target_elems = (2 << 20) // 4        # ~2 MiB f32 payload per array/step
        tb = 1
        while (tb < B
               and tb * S * tile_d < target_elems
               and _vmem_need((tb + 1) * S * tile_d, itemsize) <= tile_budget
               and grid_d * pl.cdiv(B, tb + 1) >= 2):
            tb += 1
        return tb, None, tile_d

    # ---- long-sequence fallback: tile S too (two HBM passes) ---------------
    tile_d = d_tiles[0]
    for t in d_tiles:
        if _vmem_need(8 * t, itemsize) <= tile_budget:
            tile_d = t
    target_elems = (2 << 20) // 4
    ts = 8
    while (ts * 2 <= S
           and ts * tile_d < target_elems
           and _vmem_need(2 * ts * tile_d, itemsize) <= tile_budget):
        ts *= 2
    return 1, ts, tile_d


# --------------------------------------------------------------------------- #
# pallas_call wrappers
# --------------------------------------------------------------------------- #
def _fused_call(x1, x2, gamma2d, beta2d, tb, tile_d, vmem_limit):
    B, S, D = x1.shape
    grid = (pl.cdiv(D, tile_d), pl.cdiv(B, tb))   # batch innermost: gamma/beta
    return pl.pallas_call(                        # block DMA skipped across it
        add_norm_kernel,
        out_shape=jax.ShapeDtypeStruct((B, S, D), x1.dtype),
        grid_spec=pltpu.PrefetchScalarGridSpec(
            num_scalar_prefetch=0,
            grid=grid,
            in_specs=[
                pl.BlockSpec((tb, S, tile_d), lambda d, b: (b, 0, d)),
                pl.BlockSpec((tb, S, tile_d), lambda d, b: (b, 0, d)),
                pl.BlockSpec((1, tile_d), lambda d, b: (0, d)),
                pl.BlockSpec((1, tile_d), lambda d, b: (0, d)),
            ],
            out_specs=pl.BlockSpec((tb, S, tile_d), lambda d, b: (b, 0, d)),
        ),
        compiler_params=pltpu.CompilerParams(
            dimension_semantics=("parallel", "parallel"),
            vmem_limit_bytes=int(vmem_limit),
        ),
    )(x1, x2, gamma2d, beta2d)


def _two_pass_call(x1, x2, gamma2d, beta2d, tb, ts, tile_d, vmem_limit):
    """Long-sequence path: S-tiled stats pass, then S-tiled apply pass."""
    B, S, D = x1.shape
    nd, nb, ns = pl.cdiv(D, tile_d), pl.cdiv(B, tb), pl.cdiv(S, ts)

    xsum, xssq = pl.pallas_call(
        _make_stats_kernel(S, ts),
        out_shape=(jax.ShapeDtypeStruct((B, 1, D), jnp.float32),
                   jax.ShapeDtypeStruct((B, 1, D), jnp.float32)),
        grid_spec=pltpu.PrefetchScalarGridSpec(
            num_scalar_prefetch=0,
            grid=(nd, nb, ns),
            in_specs=[
                pl.BlockSpec((tb, ts, tile_d), lambda d, b, s: (b, s, d)),
                pl.BlockSpec((tb, ts, tile_d), lambda d, b, s: (b, s, d)),
            ],
            out_specs=(
                pl.BlockSpec((tb, 1, tile_d), lambda d, b, s: (b, 0, d)),
                pl.BlockSpec((tb, 1, tile_d), lambda d, b, s: (b, 0, d)),
            ),
        ),
        compiler_params=pltpu.CompilerParams(
            dimension_semantics=("parallel", "parallel", "arbitrary"),
            vmem_limit_bytes=int(vmem_limit),
        ),
    )(x1, x2)

    return pl.pallas_call(
        _make_apply_kernel(S),
        out_shape=jax.ShapeDtypeStruct((B, S, D), x1.dtype),
        grid_spec=pltpu.PrefetchScalarGridSpec(
            num_scalar_prefetch=0,
            grid=(nd, nb, ns),
            in_specs=[
                pl.BlockSpec((tb, ts, tile_d), lambda d, b, s: (b, s, d)),
                pl.BlockSpec((tb, ts, tile_d), lambda d, b, s: (b, s, d)),
                pl.BlockSpec((tb, 1, tile_d), lambda d, b, s: (b, 0, d)),
                pl.BlockSpec((tb, 1, tile_d), lambda d, b, s: (b, 0, d)),
                pl.BlockSpec((1, tile_d), lambda d, b, s: (0, d)),
                pl.BlockSpec((1, tile_d), lambda d, b, s: (0, d)),
            ],
            out_specs=pl.BlockSpec((tb, ts, tile_d), lambda d, b, s: (b, s, d)),
        ),
        compiler_params=pltpu.CompilerParams(
            dimension_semantics=("parallel", "parallel", "parallel"),
            vmem_limit_bytes=int(vmem_limit),
        ),
    )(x1, x2, xsum, xssq, gamma2d, beta2d)


def add_and_normalize(x1, x2, gamma, beta):
    """out = InstanceNorm1d(D, affine)((x1 + x2).transpose(1,2)).transpose(1,2)."""
    assert x1.ndim == 3 and x1.shape == x2.shape
    B, S, D = x1.shape
    itemsize = jnp.dtype(x1.dtype).itemsize

    vmem_limit = _vmem_limit_bytes()
    tile_budget = int(vmem_limit * 0.7)          # headroom for compiler scratch
    tb, ts, tile_d = _plan(B, S, D, itemsize, tile_budget)

    gamma2d = gamma.reshape(1, D)
    beta2d = beta.reshape(1, D)

    if ts is None:
        return _fused_call(x1, x2, gamma2d, beta2d, tb, tile_d, vmem_limit)
    # TODO(synk): the long-sequence fallback uses one-pass (sum / sum-sq)
    # moments; a Welford / shifted variant would be more robust for extreme
    # |mean|/std ratios at very large S.
    return _two_pass_call(x1, x2, gamma2d, beta2d, tb, ts, tile_d, vmem_limit)


# --------------------------------------------------------------------------- #
# Reference + self-test
# --------------------------------------------------------------------------- #
def reference(x1, x2, gamma, beta):
    x = (x1 + x2).astype(jnp.float32)
    mean = jnp.mean(x, axis=1, keepdims=True)
    var = jnp.mean((x - mean) ** 2, axis=1, keepdims=True)
    y = (x - mean) * jax.lax.rsqrt(var + EPS)
    return (y * gamma[None, None, :] + beta[None, None, :]).astype(x1.dtype)


if __name__ == "__main__":
    # Small shapes consistent with the module: batch=2, seq=8, embedding_dim=32
    B, S, D = 2, 8, 32
    key = jax.random.PRNGKey(0)
    k1, k2, k3, k4 = jax.random.split(key, 4)

    x1 = jax.random.normal(k1, (B, S, D), dtype=jnp.float32)
    x2 = jax.random.normal(k2, (B, S, D), dtype=jnp.float32)
    # Non-trivial affine params (PyTorch default is weight=1, bias=0).
    gamma = 1.0 + 0.1 * jax.random.normal(k3, (D,), dtype=jnp.float32)
    beta = 0.1 * jax.random.normal(k4, (D,), dtype=jnp.float32)

    out = add_and_normalize(x1, x2, gamma, beta)
    jax.block_until_ready(out)
    ref = reference(x1, x2, gamma, beta)
    assert out.shape == ref.shape, "shape mismatch vs reference"
    assert jnp.allclose(out, ref, atol=1e-4, rtol=1e-5), "mismatch vs reference"

    # Also exercise the long-sequence (S-tiled, two-pass) fallback at a small,
    # ragged shape so it is known to compile and be numerically correct.
    S2 = 20
    x1b = jax.random.normal(k1, (B, S2, D), dtype=jnp.float32)
    x2b = jax.random.normal(k2, (B, S2, D), dtype=jnp.float32)
    out2 = _two_pass_call(x1b, x2b, gamma.reshape(1, D), beta.reshape(1, D),
                          tb=1, ts=8, tile_d=D, vmem_limit=_vmem_limit_bytes())
    jax.block_until_ready(out2)
    ref2 = reference(x1b, x2b, gamma, beta)
    assert jnp.allclose(out2, ref2, atol=1e-4, rtol=1e-5), "two-pass mismatch"

    print("KERNEL_OK")
</pallas_src>

<mosaic_0001>
module attributes {stable_mosaic.version = 11 : i64} {
  func.func @add_norm_kernel(%arg0: i32, %arg1: i32, %arg2: memref<1x8x32xf32, #tpu.memory_space<vmem>>, %arg3: memref<1x8x32xf32, #tpu.memory_space<vmem>>, %arg4: memref<1x32xf32, #tpu.memory_space<vmem>>, %arg5: memref<1x32xf32, #tpu.memory_space<vmem>>, %arg6: memref<1x8x32xf32, #tpu.memory_space<vmem>>) attributes {dimension_semantics = [#tpu.dimension_semantics<parallel>, #tpu.dimension_semantics<parallel>], iteration_bounds = array<i64: 1, 2>, scalar_prefetch = 0 : i64, scratch_operands = 0 : i64, tpu.core_type = #tpu.core_type<tc>, window_params = [{transform_indices = @transform_0, window_bounds = array<i64: 1, 8, 32>}, {transform_indices = @transform_1, window_bounds = array<i64: 1, 8, 32>}, {transform_indices = @transform_2, window_bounds = array<i64: 1, 32>}, {transform_indices = @transform_3, window_bounds = array<i64: 1, 32>}, {transform_indices = @transform_4, window_bounds = array<i64: 1, 8, 32>}]} {
    %c0 = arith.constant 0 : index
    %c0_0 = arith.constant 0 : index
    %c0_1 = arith.constant 0 : index
    %0 = vector.load %arg2[%c0, %c0_0, %c0_1] : memref<1x8x32xf32, #tpu.memory_space<vmem>>, vector<1x8x32xf32>
    %c0_2 = arith.constant 0 : index
    %c0_3 = arith.constant 0 : index
    %c0_4 = arith.constant 0 : index
    %1 = vector.load %arg3[%c0_2, %c0_3, %c0_4] : memref<1x8x32xf32, #tpu.memory_space<vmem>>, vector<1x8x32xf32>
    %2 = arith.addf %0, %1 : vector<1x8x32xf32>
    %cst = arith.constant dense<0.000000e+00> : vector<1x32xf32>
    %3 = vector.multi_reduction <add>, %2, %cst [1] : vector<1x8x32xf32> to vector<1x32xf32>
    %4 = vector.shape_cast %3 : vector<1x32xf32> to vector<1x1x32xf32>
    %cst_5 = arith.constant 1.250000e-01 : f32
    %5 = vector.broadcast %cst_5 : f32 to vector<1x1x32xf32>
    %6 = arith.mulf %4, %5 : vector<1x1x32xf32>
    %7 = vector.broadcast %6 : vector<1x1x32xf32> to vector<1x8x32xf32>
    %8 = arith.subf %2, %7 : vector<1x8x32xf32>
    %9 = arith.mulf %8, %8 : vector<1x8x32xf32>
    %cst_6 = arith.constant dense<0.000000e+00> : vector<1x32xf32>
    %10 = vector.multi_reduction <add>, %9, %cst_6 [1] : vector<1x8x32xf32> to vector<1x32xf32>
    %11 = vector.shape_cast %10 : vector<1x32xf32> to vector<1x1x32xf32>
    %cst_7 = arith.constant 1.250000e-01 : f32
    %12 = vector.broadcast %cst_7 : f32 to vector<1x1x32xf32>
    %13 = arith.mulf %11, %12 : vector<1x1x32xf32>
    %cst_8 = arith.constant 9.99999974E-6 : f32
    %14 = vector.broadcast %cst_8 : f32 to vector<1x1x32xf32>
    %15 = arith.addf %13, %14 : vector<1x1x32xf32>
    %16 = math.rsqrt %15 : vector<1x1x32xf32>
    %c0_9 = arith.constant 0 : index
    %c0_10 = arith.constant 0 : index
    %17 = vector.load %arg4[%c0_9, %c0_10] : memref<1x32xf32, #tpu.memory_space<vmem>>, vector<1x32xf32>
    %18 = vector.shape_cast %17 : vector<1x32xf32> to vector<1x1x32xf32>
    %19 = arith.mulf %18, %16 : vector<1x1x32xf32>
    %c0_11 = arith.constant 0 : index
    %c0_12 = arith.constant 0 : index
    %20 = vector.load %arg5[%c0_11, %c0_12] : memref<1x32xf32, #tpu.memory_space<vmem>>, vector<1x32xf32>
    %21 = vector.broadcast %19 : vector<1x1x32xf32> to vector<1x8x32xf32>
    %22 = arith.mulf %8, %21 : vector<1x8x32xf32>
    %23 = vector.shape_cast %20 : vector<1x32xf32> to vector<1x1x32xf32>
    %24 = vector.broadcast %23 : vector<1x1x32xf32> to vector<1x8x32xf32>
    %25 = arith.addf %22, %24 : vector<1x8x32xf32>
    %c0_13 = arith.constant 0 : index
    %c0_14 = arith.constant 0 : index
    %c0_15 = arith.constant 0 : index
    %26 = vector.load %arg6[%c0_13, %c0_14, %c0_15] : memref<1x8x32xf32, #tpu.memory_space<vmem>>, vector<1x8x32xf32>
    tpu.vector_store %arg6[%c0_13, %c0_14, %c0_15], %25 {strides = array<i32>} : memref<1x8x32xf32, #tpu.memory_space<vmem>>, vector<1x8x32xf32>,
    return
  }
  func.func @transform_0(%arg0: i32, %arg1: i32) -> (i32, i32, i32) {
    %c0_i32 = arith.constant 0 : i32
    %c0_i32_0 = arith.constant 0 : i32
    return %arg1, %c0_i32, %arg0 : i32, i32, i32
  }
  func.func @transform_1(%arg0: i32, %arg1: i32) -> (i32, i32, i32) {
    %c0_i32 = arith.constant 0 : i32
    %c0_i32_0 = arith.constant 0 : i32
    return %arg1, %c0_i32, %arg0 : i32, i32, i32
  }
  func.func @transform_2(%arg0: i32, %arg1: i32) -> (i32, i32) {
    %c0_i32 = arith.constant 0 : i32
    %c0_i32_0 = arith.constant 0 : i32
    return %c0_i32, %arg0 : i32, i32
  }
  func.func @transform_3(%arg0: i32, %arg1: i32) -> (i32, i32) {
    %c0_i32 = arith.constant 0 : i32
    %c0_i32_0 = arith.constant 0 : i32
    return %c0_i32, %arg0 : i32, i32
  }
  func.func @transform_4(%arg0: i32, %arg1: i32) -> (i32, i32, i32) {
    %c0_i32 = arith.constant 0 : i32
    %c0_i32_0 = arith.constant 0 : i32
    return %arg1, %c0_i32, %arg0 : i32, i32, i32
  }
}

</mosaic_0001>

<llo_original>
// kernel: tpu_custom_call.1
$region0: #{tpu_custom_call.1}
  #allocation0 [shape = 'u32[]', space=smem, size = 0x4, offset = 0x4, fixed_abs, tag = 'smem constant byte address 0x4 - core index']
  #allocation1 [shape = 'u32[144,128]{1,0:T(1,128)}', space=vmem, size = 0x12000, scoped, tag = 'internal scratch']
  %s0 = inlined_call_operand.hbm [shape: f32[2,8,32], index: 0, kind: input, shape index: {}]
  %s1 = inlined_call_operand.hbm [shape: f32[2,8,32], index: 1, kind: input, shape index: {}]
  %s2 = inlined_call_operand.vmem [shape: f32[1,32], index: 2, kind: input, shape index: {}]
  %s3 = inlined_call_operand.vmem [shape: f32[1,32], index: 3, kind: input, shape index: {}]
  %s4 = inlined_call_operand.hbm [shape: f32[2,8,32], index: 4, kind: output, shape index: {}]
  %s5 = sld [smem:[#allocation0]]
  $region57: #{tpu_custom_call.1} parent=0
    _
  %s7 = ssub.s32 1, %s5
  %s8 = scalar_select 0, %s7, %s5
  $region1: #{tpu_custom_call.1} parent=0
    #allocation2 [shape = 'u8[8192]{0}', space=vmem, size = 0x2000, scoped, tag = 'input window, operand 0']
    #allocation3 [shape = 's32[2]{0}', space=sflag, size = 0x8, scoped, tag = 'scoped memory for tpu_custom_call.1']
    #allocation4 [shape = 's32[2]{0}', space=sflag, size = 0x8, scoped, tag = 'scoped memory for tpu_custom_call.1']
    #allocation5 [shape = 'u8[8192]{0}', space=vmem, size = 0x2000, scoped, tag = 'input window, operand 1']
    #allocation6 [shape = 's32[2]{0}', space=sflag, size = 0x8, scoped, tag = 'scoped memory for tpu_custom_call.1']
    #allocation7 [shape = 'u8[8192]{0}', space=vmem, size = 0x2000, scoped, tag = 'output window, operand 0']
    %9 = vsyncpa [#allocation3], 0
    %s10 = scalar_lea.sflag [#allocation3], 1
    %11 = vsyncpa %s10, 0
    %12 = vsyncpa [#allocation6], 0
    %s13 = scalar_lea.sflag [#allocation6], 1
    %14 = vsyncpa %s13, 0
    %15 = vsyncpa [#allocation4], 0
    %s16 = scalar_lea.sflag [#allocation4], 1
    %17 = vsyncpa %s16, 0
    loop: start=0, step=1, limit=4
    $region2: #{tpu_custom_call.1} parent=1 // loop_pre_header
      _
    $region3: #{tpu_custom_call.1} parent=1 // loop_header
      %s19 = sphi 0, %s23
      %p20 = scmp.ge.s32.totalorder %s19, 4
      %s26 = sphi 0, %s38
      %s27 = sphi 0, %s34
      %s28 = sphi 0, %s26
      %s29 = sphi 0, %s27
      %s30 = sphi 0, %s28
      %s31 = sphi 0, %s29
      %s43 = sphi 0, %s45
      %s46 = sphi 0, %s43
      %s47 = sphi 0, %s46
      %s63 = sphi 0, %s47
      %s71 = sphi 0, %s73
      %s74 = sphi 0, %s71
      %s75 = sphi 0, %s74
      %s91 = sphi 0, %s75
      %s97 = sphi 0, %s99
      %s100 = sphi 0, %s97
      %s101 = sphi 0, %s100
      %s117 = sphi 0, %s101
      %s123 = sphi 0, %s125
      %s126 = sphi 0, %s123
      %s127 = sphi 0, %s126
      %s143 = sphi 0, %s127
      %s151 = sphi 0, %s153
      %s154 = sphi 0, %s151
      %s155 = sphi 0, %s154
      %s171 = sphi 0, %s155
    $region4: #{tpu_custom_call.1} parent=1 // loop_header_branch
      %22 = sbr.rel (%p20) target = $region8
    $region5: #{tpu_custom_call.1} parent=1 // loop_body
      %s24 = ssub.s32 %s19, 1
      %s25 = ssub.s32 %s19, 2
      %s32 = sadd.s32 1, %s27
      %p33 = scmp.ge.s32.totalorder %s32, 2
      %s34 = scalar_select %p33, 0, %s32
      %s35 = sadd.s32 1, %s26
      %s36 = scalar_select %p33, %s35, %s26
      %p37 = scmp.ge.s32.totalorder %s36, 1
      %s38 = scalar_select %p37, 0, %s36
      %s39 = ssub.s32 %s27, %s34
      %s40 = ssub.s32 %s26, %s38
      %s41 = sor.u32 %s39, %s40
      %p42 = scmp.eq.s32.totalorder %s41, 0
      %s44 = sadd.s32 %s43, 1
      %s45 = scalar_select %p42, %s43, %s44
      %p48 = pneg %p42
      %p49 = scmp.eq.s32.totalorder %s19, 1
      %p50 = por %p48, %p49
      %p51 = scmp.ne.s32.totalorder %s43, %s46
      %p52 = scmp.eq.s32.totalorder %s19, 0
      %p53 = por %p51, %p52
      %p54 = scmp.ne.s32.totalorder %s43, %s46
      %p55 = scmp.eq.s32.totalorder %s24, 1
      %p56 = por %p54, %p55
      %p57 = scmp.ne.s32.totalorder %s46, %s47
      %p58 = scmp.eq.s32.totalorder %s24, 0
      %p59 = por %p57, %p58
      %p60 = scmp.ne.s32.totalorder %s46, %s47
      %p61 = scmp.eq.s32.totalorder %s25, 1
      %p62 = por %p60, %p61
      %p64 = scmp.ne.s32.totalorder %s47, %s63
      %p65 = scmp.eq.s32.totalorder %s25, 0
      %p66 = por %p64, %p65
      %s67 = ssub.s32 %s27, %s34
      %s68 = ssub.s32 %s26, %s38
      %s69 = sor.u32 %s67, %s68
      %p70 = scmp.eq.s32.totalorder %s69, 0
      %s72 = sadd.s32 %s71, 1
      %s73 = scalar_select %p70, %s71, %s72
      %p76 = pneg %p70
      %p77 = scmp.eq.s32.totalorder %s19, 1
      %p78 = por %p76, %p77
      %p79 = scmp.ne.s32.totalorder %s71, %s74
      %p80 = scmp.eq.s32.totalorder %s19, 0
      %p81 = por %p79, %p80
      %p82 = scmp.ne.s32.totalorder %s71, %s74
      %p83 = scmp.eq.s32.totalorder %s24, 1
      %p84 = por %p82, %p83
      %p85 = scmp.ne.s32.totalorder %s74, %s75
      %p86 = scmp.eq.s32.totalorder %s24, 0
      %p87 = por %p85, %p86
      %p88 = scmp.ne.s32.totalorder %s74, %s75
      %p89 = scmp.eq.s32.totalorder %s25, 1
      %p90 = por %p88, %p89
      %p92 = scmp.ne.s32.totalorder %s75, %s91
      %p93 = scmp.eq.s32.totalorder %s25, 0
      %p94 = por %p92, %p93
      %s95 = ssub.s32 %s26, %s38
      %p96 = scmp.eq.s32.totalorder %s95, 0
      %s98 = sadd.s32 %s97, 1
      %s99 = scalar_select %p96, %s97, %s98
      %p102 = pneg %p96
      %p103 = scmp.eq.s32.totalorder %s19, 1
      %p104 = por %p102, %p103
      %p105 = scmp.ne.s32.totalorder %s97, %s100
      %p106 = scmp.eq.s32.totalorder %s19, 0
      %p107 = por %p105, %p106
      %p108 = scmp.ne.s32.totalorder %s97, %s100
      %p109 = scmp.eq.s32.totalorder %s24, 1
      %p110 = por %p108, %p109
      %p111 = scmp.ne.s32.totalorder %s100, %s101
      %p112 = scmp.eq.s32.totalorder %s24, 0
      %p113 = por %p111, %p112
      %p114 = scmp.ne.s32.totalorder %s100, %s101
      %p115 = scmp.eq.s32.totalorder %s25, 1
      %p116 = por %p114, %p115
      %p118 = scmp.ne.s32.totalorder %s101, %s117
      %p119 = scmp.eq.s32.totalorder %s25, 0
      %p120 = por %p118, %p119
      %s121 = ssub.s32 %s26, %s38
      %p122 = scmp.eq.s32.totalorder %s121, 0
      %s124 = sadd.s32 %s123, 1
      %s125 = scalar_select %p122, %s123, %s124
      %p128 = pneg %p122
      %p129 = scmp.eq.s32.totalorder %s19, 1
      %p130 = por %p128, %p129
      %p131 = scmp.ne.s32.totalorder %s123, %s126
      %p132 = scmp.eq.s32.totalorder %s19, 0
      %p133 = por %p131, %p132
      %p134 = scmp.ne.s32.totalorder %s123, %s126
      %p135 = scmp.eq.s32.totalorder %s24, 1
      %p136 = por %p134, %p135
      %p137 = scmp.ne.s32.totalorder %s126, %s127
      %p138 = scmp.eq.s32.totalorder %s24, 0
      %p139 = por %p137, %p138
      %p140 = scmp.ne.s32.totalorder %s126, %s127
      %p141 = scmp.eq.s32.totalorder %s25, 1
      %p142 = por %p140, %p141
      %p144 = scmp.ne.s32.totalorder %s127, %s143
      %p145 = scmp.eq.s32.totalorder %s25, 0
      %p146 = por %p144, %p145
      %s147 = ssub.s32 %s27, %s34
      %s148 = ssub.s32 %s26, %s38
      %s149 = sor.u32 %s147, %s148
      %p150 = scmp.eq.s32.totalorder %s149, 0
      %s152 = sadd.s32 %s151, 1
      %s153 = scalar_select %p150, %s151, %s152
      %p156 = pneg %p150
      %p157 = scmp.eq.s32.totalorder %s19, 1
      %p158 = por %p156, %p157
      %p159 = scmp.ne.s32.totalorder %s151, %s154
      %p160 = scmp.eq.s32.totalorder %s19, 0
      %p161 = por %p159, %p160
      %p162 = scmp.ne.s32.totalorder %s151, %s154
      %p163 = scmp.eq.s32.totalorder %s24, 1
      %p164 = por %p162, %p163
      %p165 = scmp.ne.s32.totalorder %s154, %s155
      %p166 = scmp.eq.s32.totalorder %s24, 0
      %p167 = por %p165, %p166
      %p168 = scmp.ne.s32.totalorder %s154, %s155
      %p169 = scmp.eq.s32.totalorder %s25, 1
      %p170 = por %p168, %p169
      %p172 = scmp.ne.s32.totalorder %s155, %s171
      %p173 = scmp.eq.s32.totalorder %s25, 0
      %p174 = por %p172, %p173
      %p175 = scmp.le.s32.totalorder 1, %s19
      %p176 = scmp.lt.s32.totalorder %s19, 3
      %p177 = pnand %p175, %p176
      %p178 = pneg %p177
      // Predicated region
      $region9: #{tpu_custom_call.1} parent=5 // pred_check
        _
      $region10: #{tpu_custom_call.1} parent=5 // pred_check_branch
        %180 = sbr.rel (%p177) target = $region12
      $region11: #{tpu_custom_call.1} parent=5 // pred_region
        %s181 = ssub.s32 %s19, 1
        // Predicated region
        $region13: #{tpu_custom_call.1} parent=11 // pred_check
          %p182 = pneg %p113
        $region14: #{tpu_custom_call.1} parent=11 // pred_check_branch
          %184 = sbr.rel (%p182) target = $region16
        $region15: #{tpu_custom_call.1} parent=11 // pred_region
          %p185 = scmp.lt.s32.totalorder %s28, 0
          %s186 = scalar_select %p185, %s28, 0
          %s187 = scalar_lea.vmem %s2, %s186
        $region16: #{tpu_custom_call.1} parent=11 // pred_fallthru
          _
        // Predicated region
        $region17: #{tpu_custom_call.1} parent=11 // pred_check
          %p188 = pneg %p139
        $region18: #{tpu_custom_call.1} parent=11 // pred_check_branch
          %190 = sbr.rel (%p188) target = $region20
        $region19: #{tpu_custom_call.1} parent=11 // pred_region
          %p191 = scmp.lt.s32.totalorder %s28, 0
          %s192 = scalar_select %p191, %s28, 0
          %s193 = scalar_lea.vmem %s3, %s192
        $region20: #{tpu_custom_call.1} parent=11 // pred_fallthru
          _
      $region12: #{tpu_custom_call.1} parent=5 // pred_fallthru
        _
      %p194 = scmp.lt.s32.totalorder %s19, 2
      // Predicated region
      $region21: #{tpu_custom_call.1} parent=5 // pred_check
        %p195 = pneg %p194
      $region22: #{tpu_custom_call.1} parent=5 // pred_check_branch
        %197 = sbr.rel (%p195) target = $region24
      $region23: #{tpu_custom_call.1} parent=5 // pred_region
        // Predicated region
        $region25: #{tpu_custom_call.1} parent=23 // pred_check
          %p198 = pneg %p53
        $region26: #{tpu_custom_call.1} parent=23 // pred_check_branch
          %200 = sbr.rel (%p198) target = $region28
        $region27: #{tpu_custom_call.1} parent=23 // pred_region
          %s201 = sand.u32 %s43, 1
          %s202 = scalar_lea.sflag [#allocation3], %s201
          %s203 = sand.u32 %s43, 1
          %s204 = smul.addr %s203, 8
          %s205 = scalar_lea.vmem [#allocation2], %s204
          %s207 = ssub.s32 128, 128
          %208 = vsyncadd %s202, %s207
          %s209 = sadd.s32 %s26, %s27
          %s210 = smul.addr %s209, 128
          %s211 = scalar_lea.hbm %s0, %s210
          %s213 = sshll.u32 %s205, 4
          %s214 = int_to_ptr.vmem [resolvable:$true] %s213
          %216 = dma.hbm_to_vmem [thread:$0]  %s211, 128, %s214, %s202
        $region28: #{tpu_custom_call.1} parent=23 // pred_fallthru
          _
        // Predicated region
        $region29: #{tpu_custom_call.1} parent=23 // pred_check
          %p217 = pneg %p81
        $region30: #{tpu_custom_call.1} parent=23 // pred_check_branch
          %219 = sbr.rel (%p217) target = $region32
        $region31: #{tpu_custom_call.1} parent=23 // pred_region
          %s220 = sand.u32 %s71, 1
          %s221 = scalar_lea.sflag [#allocation6], %s220
          %s222 = sand.u32 %s71, 1
          %s223 = smul.addr %s222, 8
          %s224 = scalar_lea.vmem [#allocation5], %s223
          %s226 = ssub.s32 128, 128
          %227 = vsyncadd %s221, %s226
          %s228 = sadd.s32 %s26, %s27
          %s229 = smul.addr %s228, 128
          %s230 = scalar_lea.hbm %s1, %s229
          %s232 = sshll.u32 %s224, 4
          %s233 = int_to_ptr.vmem [resolvable:$true] %s232
          %235 = dma.hbm_to_vmem [thread:$0]  %s230, 128, %s233, %s221
        $region32: #{tpu_custom_call.1} parent=23 // pred_fallthru
          _
      $region24: #{tpu_custom_call.1} parent=5 // pred_fallthru
        _
      %p236 = scmp.le.s32.totalorder 1, %s19
      %p237 = scmp.lt.s32.totalorder %s19, 3
      %p238 = pnand %p236, %p237
      %p239 = pneg %p238
      // Predicated region
      $region33: #{tpu_custom_call.1} parent=5 // pred_check
        _
      $region34: #{tpu_custom_call.1} parent=5 // pred_check_branch
        %241 = sbr.rel (%p238) target = $region36
      $region35: #{tpu_custom_call.1} parent=5 // pred_region
        %s242 = ssub.s32 %s19, 1
        %s243 = sand.u32 %s46, 1
        %s244 = scalar_lea.sflag [#allocation3], %s243
        %s245 = sand.u32 %s46, 1
        %s246 = smul.addr %s245, 8
        %s247 = scalar_lea.vmem [#allocation2], %s246
        // Predicated region
        $region37: #{tpu_custom_call.1} parent=35 // pred_check
          %p248 = pneg %p59
        $region38: #{tpu_custom_call.1} parent=35 // pred_check_branch
          %250 = sbr.rel (%p248) target = $region40
        $region39: #{tpu_custom_call.1} parent=35 // pred_region
          %251 = dma.done %s244, 128
        $region40: #{tpu_custom_call.1} parent=35 // pred_fallthru
          _
        %s252 = sand.u32 %s74, 1
        %s253 = scalar_lea.sflag [#allocation6], %s252
        %s254 = sand.u32 %s74, 1
        %s255 = smul.addr %s254, 8
        %s256 = scalar_lea.vmem [#allocation5], %s255
        // Predicated region
        $region41: #{tpu_custom_call.1} parent=35 // pred_check
          %p257 = pneg %p87
        $region42: #{tpu_custom_call.1} parent=35 // pred_check_branch
          %259 = sbr.rel (%p257) target = $region44
        $region43: #{tpu_custom_call.1} parent=35 // pred_region
          %260 = dma.done %s253, 128
        $region44: #{tpu_custom_call.1} parent=35 // pred_fallthru
          _
        %s261 = sand.u32 %s46, 1
        %s262 = scalar_lea.sflag [#allocation3], %s261
        %s263 = sand.u32 %s46, 1
        %s264 = smul.addr %s263, 8
        %s265 = scalar_lea.vmem [#allocation2], %s264
        %p266 = pneg %p59
        %p267 = pneg %p56
        %s268 = sand.u32 %s74, 1
        %s269 = scalar_lea.sflag [#allocation6], %s268
        %s270 = sand.u32 %s74, 1
        %s271 = smul.addr %s270, 8
        %s272 = scalar_lea.vmem [#allocation5], %s271
        %p273 = pneg %p87
        %p274 = pneg %p84
        %p275 = scmp.lt.s32.totalorder %s28, 0
        %s276 = scalar_select %p275, %s28, 0
        %s277 = scalar_lea.vmem %s2, %s276
        %p278 = pneg %p113
        %p279 = pneg %p110
        %p280 = scmp.lt.s32.totalorder %s28, 0
        %s281 = scalar_select %p280, %s28, 0
        %s282 = scalar_lea.vmem %s3, %s281
        %p283 = pneg %p139
        %p284 = pneg %p136
        %p285 = pneg %p167
        %p286 = pneg %p164
        %s287 = sand.u32 %s154, 1
        %s288 = scalar_lea.sflag [#allocation4], %s287
        %s289 = sand.u32 %s154, 1
        %s290 = smul.addr %s289, 8
        %s291 = scalar_lea.vmem [#allocation7], %s290
        %p292 = scmp.lt.s32.totalorder %s28, 0
        %s293 = scalar_select %p292, %s28, 0
        %s294 = scalar_lea.vmem %s2, %s293
        %p295 = scmp.lt.s32.totalorder %s28, 0
        %s296 = scalar_select %p295, %s28, 0
        %s297 = scalar_lea.vmem %s3, %s296
        %v298 = vld [vmem:[%s247] sm:$0xff]
        %v299 = vld [vmem:[%s256] sm:$0xff]
        %v300 = vadd.f32 %v298, %v299
        %vm301 = vcmask 261120
        %v302 = vsel %vm301, %v300, 0.0
        %v303 = vrot.slane %v302, 4
        %v304 = vadd.f32 %v302, %v303
        %v305 = vrot.slane %v304, 2
        %v306 = vadd.f32 %v304, %v305
        %v307 = vrot.slane %v306, 1
        %v308 = vadd.f32 %v306, %v307
        %v309 = vmul.f32 %v308, 0.125
        %v310 = vsub.f32 %v300, %v309
        %v311 = vmul.f32 %v310, %v310
        %v312 = vsel %vm301, %v311, 0.0
        %v313 = vrot.slane %v312, 4
        %v314 = vadd.f32 %v312, %v313
        %v315 = vrot.slane %v314, 2
        %v316 = vadd.f32 %v314, %v315
        %v317 = vrot.slane %v316, 1
        %v318 = vadd.f32 %v316, %v317
        %v319 = vmul.f32 %v318, 0.125
        %v320 = vadd.f32 %v319, 1e-05
        %v321 = vrsqrt.pop %v320
        %v322 = vld [vmem:[%s294] sm:$0x1]
        %v323 = vmul.f32 %v322, %v321
        %v324 = vld [vmem:[%s297] sm:$0x1]
        %v326 = vlaneseq
        %v327 = vshrl.u32 %v326, 7
        %v328 = vsub.s32 0, %v327
        %v329 = vrot.slane %v323, %v328
        %v331 = vmul.f32 %v310, %v329
        %v333 = vlaneseq
        %v334 = vshrl.u32 %v333, 7
        %v335 = vsub.s32 0, %v334
        %v336 = vrot.slane %v324, %v335
        %v338 = vadd.f32 %v331, %v336
        %339 = vst.msk [vmem:[%s291] sm:$0xff] %vm301, %v338
        %s340 = sand.u32 %s154, 1
        %s341 = scalar_lea.sflag [#allocation4], %s340
        %s342 = sand.u32 %s154, 1
        %s343 = smul.addr %s342, 8
        %s344 = scalar_lea.vmem [#allocation7], %s343
        // Predicated region
        $region45: #{tpu_custom_call.1} parent=35 // pred_check
          %p345 = pneg %p164
        $region46: #{tpu_custom_call.1} parent=35 // pred_check_branch
          %347 = sbr.rel (%p345) target = $region48
        $region47: #{tpu_custom_call.1} parent=35 // pred_region
          %s349 = ssub.s32 128, 128
          %350 = vsyncadd %s341, %s349
          %s351 = sadd.s32 %s28, %s29
          %s352 = smul.addr %s351, 128
          %s353 = scalar_lea.hbm %s4, %s352
          %s355 = sshll.u32 %s344, 4
          %s356 = int_to_ptr.vmem [resolvable:$true] %s355
          %358 = dma.vmem_to_hbm [thread:$0]  %s356, 128, %s353, %s341
        $region48: #{tpu_custom_call.1} parent=35 // pred_fallthru
          _
      $region36: #{tpu_custom_call.1} parent=5 // pred_fallthru
        _
      %p359 = scmp.le.s32.totalorder 2, %s19
      // Predicated region
      $region49: #{tpu_custom_call.1} parent=5 // pred_check
        %p360 = pneg %p359
      $region50: #{tpu_custom_call.1} parent=5 // pred_check_branch
        %362 = sbr.rel (%p360) target = $region52
      $region51: #{tpu_custom_call.1} parent=5 // pred_region
        %s363 = ssub.s32 %s19, 2
        // Predicated region
        $region53: #{tpu_custom_call.1} parent=51 // pred_check
          %p364 = pneg %p170
        $region54: #{tpu_custom_call.1} parent=51 // pred_check_branch
          %366 = sbr.rel (%p364) target = $region56
        $region55: #{tpu_custom_call.1} parent=51 // pred_region
          %s367 = sand.u32 %s155, 1
          %s368 = scalar_lea.sflag [#allocation4], %s367
          %s369 = sand.u32 %s155, 1
          %s370 = smul.addr %s369, 8
          %s371 = scalar_lea.vmem [#allocation7], %s370
          %372 = dma.done %s368, 128
        $region56: #{tpu_custom_call.1} parent=51 // pred_fallthru
          _
      $region52: #{tpu_custom_call.1} parent=5 // pred_fallthru
        _
    $region6: #{tpu_custom_call.1} parent=1 // loop_footer
      %s23 = sadd.s32 1, %s19
    $region7: #{tpu_custom_call.1} parent=1 // loop_footer_branch
      %18 = sbr.rel target = $region3
    $region8: #{tpu_custom_call.1} parent=1 // loop_exit
      _
    %373 = vsyncpa [#allocation3], 1
    %s374 = scalar_lea.sflag [#allocation3], 1
    %375 = vsyncpa %s374, 1
    %376 = vsyncpa [#allocation6], 1
    %s377 = scalar_lea.sflag [#allocation6], 1
    %378 = vsyncpa %s377, 1
    %379 = vsyncpa [#allocation4], 1
    %s380 = scalar_lea.sflag [#allocation4], 1
    %381 = vsyncpa %s380, 1

</llo_original>
